<compile_context>
chip_gen: v6e
topology: v6e:2x2x1
jax: 0.10.0
libtpu: 0.0.40
codegen_flags: <defaults>
</compile_context>

<pallas_src>
import math
import jax
import jax.numpy as jnp
from jax.experimental import pallas as pl
from jax.experimental.pallas import tpu as pltpu


def actor_mlp_kernel(x_ref, w1_ref, b1_ref, w2_ref, b2_ref, w3_ref, b3_ref, o_ref):
    # x tile: (tb, n_in) f32 -> bf16 operands for the MXU, f32 accumulation.
    x = x_ref[...].astype(jnp.bfloat16)

    # h1 = relu(x @ W1 + b1)   -> (tb, 512), elementwise in f32
    h1 = jnp.dot(x, w1_ref[...], preferred_element_type=jnp.float32) + b1_ref[...]
    h1 = jnp.maximum(h1, 0.0)

    # h2 = relu(h1 @ W2 + b2)  -> (tb, 256)
    h2 = jnp.dot(h1.astype(jnp.bfloat16), w2_ref[...],
                 preferred_element_type=jnp.float32) + b2_ref[...]
    h2 = jnp.maximum(h2, 0.0)

    # a = h2 @ W3 + b3         -> (tb, n_out_pad), lane-dense store
    a = jnp.dot(h2.astype(jnp.bfloat16), w3_ref[...],
                preferred_element_type=jnp.float32) + b3_ref[...]
    o_ref[...] = a.astype(o_ref.dtype)


def _round_up(x, m):
    return ((x + m - 1) // m) * m


def actor_forward(state, params, *, tb=256):
    """state: (B, 1, n_input); returns (B, n_out) float32."""
    w1, b1, w2, b2, w3, b3 = params
    x = jnp.squeeze(state, axis=1).astype(jnp.float32)  # (B, n_in)
    B, n_in = x.shape
    n_out = w3.shape[1]

    # --- weights as bf16 (memory-bound kernel: halve HBM weight traffic) ---
    w1b = w1.astype(jnp.bfloat16)
    w2b = w2.astype(jnp.bfloat16)

    # --- pad output features to a multiple of 128 (lane-dense output) ---
    n_out_pad = _round_up(max(n_out, 128), 128)
    w3p = jnp.zeros((w3.shape[0], n_out_pad), jnp.bfloat16)
    w3p = w3p.at[:, :n_out].set(w3.astype(jnp.bfloat16))
    b3p = jnp.zeros((1, n_out_pad), jnp.float32).at[:, :n_out].set(
        b3.reshape(1, -1).astype(jnp.float32))

    # --- biases as (1, N) f32 rows ---
    b1r = b1.reshape(1, -1).astype(jnp.float32)
    b2r = b2.reshape(1, -1).astype(jnp.float32)

    # --- batch tiling: big tile, pad batch up to a multiple of the tile ---
    tb_eff = min(tb, _round_up(B, 8))          # never larger than padded batch
    B_pad = _round_up(B, tb_eff)
    if B_pad != B:
        x = jnp.pad(x, ((0, B_pad - B), (0, 0)))

    grid = (B_pad // tb_eff,)

    out = pl.pallas_call(
        actor_mlp_kernel,
        out_shape=jax.ShapeDtypeStruct((B_pad, n_out_pad), jnp.float32),
        grid_spec=pltpu.PrefetchScalarGridSpec(
            num_scalar_prefetch=0,
            grid=grid,
            in_specs=[
                pl.BlockSpec((tb_eff, n_in), lambda i: (i, 0)),   # x batch tile
                pl.BlockSpec(w1b.shape, lambda i: (0, 0)),        # weights stay
                pl.BlockSpec(b1r.shape, lambda i: (0, 0)),        # VMEM-resident
                pl.BlockSpec(w2b.shape, lambda i: (0, 0)),        # (constant
                pl.BlockSpec(b2r.shape, lambda i: (0, 0)),        #  index maps)
                pl.BlockSpec(w3p.shape, lambda i: (0, 0)),
                pl.BlockSpec(b3p.shape, lambda i: (0, 0)),
            ],
            out_specs=pl.BlockSpec((tb_eff, n_out_pad), lambda i: (i, 0)),
        ),
        compiler_params=pltpu.CompilerParams(
            dimension_semantics=("parallel",),
        ),
    )(x, w1b, b1r, w2b, b2r, w3p, b3p)

    # strip batch padding and output-lane padding
    return out[:B, :n_out]


def init_params(key, n_input, n_output):
    """Matches the PyTorch module: xavier_uniform_ with relu/relu/tanh gains
    for weights, PyTorch-default uniform(-1/sqrt(fan_in), 1/sqrt(fan_in)) for
    biases. Weights stored as (in, out)."""
    k1, k2, k3, kb1, kb2, kb3 = jax.random.split(key, 6)

    def xavier(k, fan_in, fan_out, gain):
        bound = gain * math.sqrt(6.0 / (fan_in + fan_out))
        return jax.random.uniform(k, (fan_in, fan_out), jnp.float32, -bound, bound)

    def bias(k, fan_in, fan_out):
        bound = 1.0 / math.sqrt(fan_in)
        return jax.random.uniform(k, (fan_out,), jnp.float32, -bound, bound)

    g_relu = math.sqrt(2.0)
    g_tanh = 5.0 / 3.0

    w1 = xavier(k1, n_input, 512, g_relu)
    w2 = xavier(k2, 512, 256, g_relu)
    w3 = xavier(k3, 256, n_output, g_tanh)
    b1 = bias(kb1, n_input, 512)
    b2 = bias(kb2, 512, 256)
    b3 = bias(kb3, 256, n_output)
    return (w1, b1, w2, b2, w3, b3)


def actor_ref(state, params):
    """Pure-JAX reference mirroring the kernel's numerics (bf16 weights,
    f32 accumulation, f32 elementwise)."""
    w1, b1, w2, b2, w3, b3 = params
    x = jnp.squeeze(state, axis=1).astype(jnp.float32)

    def lin(h, w, b):
        return jnp.dot(h.astype(jnp.bfloat16), w.astype(jnp.bfloat16),
                       preferred_element_type=jnp.float32) + b

    h1 = jax.nn.relu(lin(x, w1, b1))
    h2 = jax.nn.relu(lin(h1, w2, b2))
    return lin(h2, w3, b3)


if __name__ == "__main__":
    key = jax.random.PRNGKey(0)
    k_param, k_state1, k_state2 = jax.random.split(key, 3)

    n_input, n_output = 16, 8
    params = init_params(k_param, n_input, n_output)

    # Case 1: small batch (grid = 1, tile capped to the padded batch)
    batch1 = 8
    state1 = jax.random.normal(k_state1, (batch1, 1, n_input), dtype=jnp.float32)
    out1 = jax.block_until_ready(actor_forward(state1, params))
    ref1 = actor_ref(state1, params)
    assert out1.shape == (batch1, n_output)
    assert jnp.allclose(out1, ref1, atol=1e-3, rtol=1e-3), "mismatch (small batch)"

    # Case 2: ragged larger batch (exercises batch padding + multi-step grid)
    batch2 = 300
    state2 = jax.random.normal(k_state2, (batch2, 1, n_input), dtype=jnp.float32)
    out2 = jax.block_until_ready(actor_forward(state2, params, tb=256))
    ref2 = actor_ref(state2, params)
    assert out2.shape == (batch2, n_output)
    assert jnp.allclose(out2, ref2, atol=1e-3, rtol=1e-3), "mismatch (large batch)"

    print("KERNEL_OK")
</pallas_src>

<mosaic_0001>
module attributes {stable_mosaic.version = 11 : i64} {
  func.func @actor_mlp_kernel(%arg0: i32, %arg1: memref<8x16xf32, #tpu.memory_space<vmem>>, %arg2: memref<16x512xbf16, #tpu.memory_space<vmem>>, %arg3: memref<1x512xf32, #tpu.memory_space<vmem>>, %arg4: memref<512x256xbf16, #tpu.memory_space<vmem>>, %arg5: memref<1x256xf32, #tpu.memory_space<vmem>>, %arg6: memref<256x128xbf16, #tpu.memory_space<vmem>>, %arg7: memref<1x128xf32, #tpu.memory_space<vmem>>, %arg8: memref<8x128xf32, #tpu.memory_space<vmem>>) attributes {dimension_semantics = [#tpu.dimension_semantics<parallel>], iteration_bounds = array<i64: 1>, scalar_prefetch = 0 : i64, scratch_operands = 0 : i64, tpu.core_type = #tpu.core_type<tc>, window_params = [{transform_indices = @transform_0, window_bounds = array<i64: 8, 16>}, {pipeline_mode = #tpu.pipeline_mode<synchronous>, transform_indices = @transform_1, window_bounds = array<i64: 16, 512>}, {pipeline_mode = #tpu.pipeline_mode<synchronous>, transform_indices = @transform_2, window_bounds = array<i64: 1, 512>}, {pipeline_mode = #tpu.pipeline_mode<synchronous>, transform_indices = @transform_3, window_bounds = array<i64: 512, 256>}, {pipeline_mode = #tpu.pipeline_mode<synchronous>, transform_indices = @transform_4, window_bounds = array<i64: 1, 256>}, {pipeline_mode = #tpu.pipeline_mode<synchronous>, transform_indices = @transform_5, window_bounds = array<i64: 256, 128>}, {pipeline_mode = #tpu.pipeline_mode<synchronous>, transform_indices = @transform_6, window_bounds = array<i64: 1, 128>}, {transform_indices = @transform_7, window_bounds = array<i64: 8, 128>}]} {
    %c0 = arith.constant 0 : index
    %c0_0 = arith.constant 0 : index
    %0 = vector.load %arg1[%c0, %c0_0] : memref<8x16xf32, #tpu.memory_space<vmem>>, vector<8x16xf32>
    %1 = arith.truncf %0 : vector<8x16xf32> to vector<8x16xbf16>
    %c0_1 = arith.constant 0 : index
    %c0_2 = arith.constant 0 : index
    %2 = vector.load %arg2[%c0_1, %c0_2] : memref<16x512xbf16, #tpu.memory_space<vmem>>, vector<16x512xbf16>
    %cst = arith.constant dense<0.000000e+00> : vector<8x512xf32>
    %3 = tpu.matmul %1, %2, %cst {dimension_numbers = #tpu.dot_dimension_numbers<[1], [0], [0], [1], [0, 0, 1, 1], [], []>} : vector<8x16xbf16>, vector<16x512xbf16>, vector<8x512xf32> -> vector<8x512xf32>
    %c0_3 = arith.constant 0 : index
    %c0_4 = arith.constant 0 : index
    %4 = vector.load %arg3[%c0_3, %c0_4] : memref<1x512xf32, #tpu.memory_space<vmem>>, vector<1x512xf32>
    %5 = vector.broadcast %4 : vector<1x512xf32> to vector<8x512xf32>
    %6 = arith.addf %3, %5 : vector<8x512xf32>
    %cst_5 = arith.constant 0.000000e+00 : f32
    %7 = vector.broadcast %cst_5 : f32 to vector<8x512xf32>
    %8 = arith.maximumf %6, %7 : vector<8x512xf32>
    %9 = arith.truncf %8 : vector<8x512xf32> to vector<8x512xbf16>
    %c0_6 = arith.constant 0 : index
    %c0_7 = arith.constant 0 : index
    %10 = vector.load %arg4[%c0_6, %c0_7] : memref<512x256xbf16, #tpu.memory_space<vmem>>, vector<512x256xbf16>
    %cst_8 = arith.constant dense<0.000000e+00> : vector<8x256xf32>
    %11 = tpu.matmul %9, %10, %cst_8 {dimension_numbers = #tpu.dot_dimension_numbers<[1], [0], [0], [1], [0, 0, 1, 1], [], []>} : vector<8x512xbf16>, vector<512x256xbf16>, vector<8x256xf32> -> vector<8x256xf32>
    %c0_9 = arith.constant 0 : index
    %c0_10 = arith.constant 0 : index
    %12 = vector.load %arg5[%c0_9, %c0_10] : memref<1x256xf32, #tpu.memory_space<vmem>>, vector<1x256xf32>
    %13 = vector.broadcast %12 : vector<1x256xf32> to vector<8x256xf32>
    %14 = arith.addf %11, %13 : vector<8x256xf32>
    %cst_11 = arith.constant 0.000000e+00 : f32
    %15 = vector.broadcast %cst_11 : f32 to vector<8x256xf32>
    %16 = arith.maximumf %14, %15 : vector<8x256xf32>
    %17 = arith.truncf %16 : vector<8x256xf32> to vector<8x256xbf16>
    %c0_12 = arith.constant 0 : index
    %c0_13 = arith.constant 0 : index
    %18 = vector.load %arg6[%c0_12, %c0_13] : memref<256x128xbf16, #tpu.memory_space<vmem>>, vector<256x128xbf16>
    %cst_14 = arith.constant dense<0.000000e+00> : vector<8x128xf32>
    %19 = tpu.matmul %17, %18, %cst_14 {dimension_numbers = #tpu.dot_dimension_numbers<[1], [0], [0], [1], [0, 0, 1, 1], [], []>} : vector<8x256xbf16>, vector<256x128xbf16>, vector<8x128xf32> -> vector<8x128xf32>
    %c0_15 = arith.constant 0 : index
    %c0_16 = arith.constant 0 : index
    %20 = vector.load %arg7[%c0_15, %c0_16] : memref<1x128xf32, #tpu.memory_space<vmem>>, vector<1x128xf32>
    %21 = vector.broadcast %20 : vector<1x128xf32> to vector<8x128xf32>
    %22 = arith.addf %19, %21 : vector<8x128xf32>
    %c0_17 = arith.constant 0 : index
    %c0_18 = arith.constant 0 : index
    %23 = vector.load %arg8[%c0_17, %c0_18] : memref<8x128xf32, #tpu.memory_space<vmem>>, vector<8x128xf32>
    tpu.vector_store %arg8[%c0_17, %c0_18], %22 {strides = array<i32>} : memref<8x128xf32, #tpu.memory_space<vmem>>, vector<8x128xf32>,
    return
  }
  func.func @transform_0(%arg0: i32) -> (i32, i32) {
    %c0_i32 = arith.constant 0 : i32
    %c0_i32_0 = arith.constant 0 : i32
    return %arg0, %c0_i32 : i32, i32
  }
  func.func @transform_1(%arg0: i32) -> (i32, i32) {
    %c0_i32 = arith.constant 0 : i32
    %c0_i32_0 = arith.constant 0 : i32
    %c0_i32_1 = arith.constant 0 : i32
    return %c0_i32, %c0_i32_0 : i32, i32
  }
  func.func @transform_2(%arg0: i32) -> (i32, i32) {
    %c0_i32 = arith.constant 0 : i32
    %c0_i32_0 = arith.constant 0 : i32
    %c0_i32_1 = arith.constant 0 : i32
    return %c0_i32, %c0_i32_0 : i32, i32
  }
  func.func @transform_3(%arg0: i32) -> (i32, i32) {
    %c0_i32 = arith.constant 0 : i32
    %c0_i32_0 = arith.constant 0 : i32
    %c0_i32_1 = arith.constant 0 : i32
    return %c0_i32, %c0_i32_0 : i32, i32
  }
  func.func @transform_4(%arg0: i32) -> (i32, i32) {
    %c0_i32 = arith.constant 0 : i32
    %c0_i32_0 = arith.constant 0 : i32
    %c0_i32_1 = arith.constant 0 : i32
    return %c0_i32, %c0_i32_0 : i32, i32
  }
  func.func @transform_5(%arg0: i32) -> (i32, i32) {
    %c0_i32 = arith.constant 0 : i32
    %c0_i32_0 = arith.constant 0 : i32
    %c0_i32_1 = arith.constant 0 : i32
    return %c0_i32, %c0_i32_0 : i32, i32
  }
  func.func @transform_6(%arg0: i32) -> (i32, i32) {
    %c0_i32 = arith.constant 0 : i32
    %c0_i32_0 = arith.constant 0 : i32
    %c0_i32_1 = arith.constant 0 : i32
    return %c0_i32, %c0_i32_0 : i32, i32
  }
  func.func @transform_7(%arg0: i32) -> (i32, i32) {
    %c0_i32 = arith.constant 0 : i32
    %c0_i32_0 = arith.constant 0 : i32
    return %arg0, %c0_i32 : i32, i32
  }
}

</mosaic_0001>

<llo_original>
// kernel: tpu_custom_call.1
$region0: #{tpu_custom_call.1}
  #allocation0 [shape = 'u32[]', space=smem, size = 0x4, offset = 0x4, fixed_abs, tag = 'smem constant byte address 0x4 - core index']
  #allocation1 [shape = 'u32[144,128]{1,0:T(1,128)}', space=vmem, size = 0x12000, scoped, tag = 'internal scratch']
  %s0 = inlined_call_operand.hbm [shape: f32[8,16], index: 0, kind: input, shape index: {}]
  %s1 = inlined_call_operand.hbm [shape: bf16[16,512], index: 1, kind: input, shape index: {}]
  %s2 = inlined_call_operand.hbm [shape: f32[1,512], index: 2, kind: input, shape index: {}]
  %s3 = inlined_call_operand.hbm [shape: bf16[512,256], index: 3, kind: input, shape index: {}]
  %s4 = inlined_call_operand.vmem [shape: f32[1,256], index: 4, kind: input, shape index: {}]
  %s5 = inlined_call_operand.hbm [shape: bf16[256,128], index: 5, kind: input, shape index: {}]
  %s6 = inlined_call_operand.vmem [shape: f32[1,128], index: 6, kind: input, shape index: {}]
  %s7 = inlined_call_operand.hbm [shape: f32[8,128], index: 7, kind: output, shape index: {}]
  %s8 = sld [smem:[#allocation0]]
  $region58: #{tpu_custom_call.1} parent=0
    _
  %s10 = ssub.s32 1, %s8
  %s11 = scalar_select 0, %s10, %s8
  $region1: #{tpu_custom_call.1} parent=0
    #allocation2 [shape = 'u8[4096]{0}', space=vmem, size = 0x1000, scoped, tag = 'input window, operand 0, single buffered']
    #allocation3 [shape = 's32[1]{0}', space=sflag, size = 0x4, scoped, tag = 'scoped memory for tpu_custom_call.1']
    #allocation4 [shape = 's32[1]{0}', space=sflag, size = 0x4, scoped, tag = 'scoped memory for tpu_custom_call.1']
    #allocation5 [shape = 'u8[16384]{0}', space=vmem, size = 0x4000, scoped, tag = 'input window, operand 1, single buffered']
    #allocation6 [shape = 's32[1]{0}', space=sflag, size = 0x4, scoped, tag = 'scoped memory for tpu_custom_call.1']
    #allocation7 [shape = 'u8[2048]{0}', space=vmem, size = 0x800, scoped, tag = 'input window, operand 2, single buffered']
    #allocation8 [shape = 'u8[262144]{0}', space=vmem, size = 0x40000, scoped, tag = 'input window, operand 3, single buffered']
    #allocation9 [shape = 's32[1]{0}', space=sflag, size = 0x4, scoped, tag = 'scoped memory for tpu_custom_call.1']
    #allocation10 [shape = 'u8[65536]{0}', space=vmem, size = 0x10000, scoped, tag = 'input window, operand 5, single buffered']
    #allocation11 [shape = 'u8[4096]{0}', space=vmem, size = 0x1000, scoped, tag = 'output window, operand 0, single buffered']
    %12 = vsyncpa [#allocation3], 0
    %13 = vsyncpa [#allocation6], 0
    %14 = vsyncpa [#allocation9], 0
    %15 = vsyncpa [#allocation4], 0
    // Predicated region
    $region2: #{tpu_custom_call.1} parent=1 // pred_check
      _
    $region3: #{tpu_custom_call.1} parent=1 // pred_check_branch
      %17 = sbr.rel (0) target = $region5
    $region4: #{tpu_custom_call.1} parent=1 // pred_region
      %s19 = ssub.s32 128, 128
      %20 = vsyncadd [#allocation3], %s19
      %s22 = sshll.u32 [#allocation2], 4
      %s23 = int_to_ptr.vmem [resolvable:$true] %s22
      %25 = dma.hbm_to_vmem [thread:$0]  %s0, 128, %s23, [#allocation3]
    $region5: #{tpu_custom_call.1} parent=1 // pred_fallthru
      _
    // Predicated region
    $region6: #{tpu_custom_call.1} parent=1 // pred_check
      _
    $region7: #{tpu_custom_call.1} parent=1 // pred_check_branch
      %27 = sbr.rel (0) target = $region9
    $region8: #{tpu_custom_call.1} parent=1 // pred_region
      %s29 = ssub.s32 512, 512
      %30 = vsyncadd [#allocation6], %s29
      %s31 = sshll.u32 [#allocation5], 4
      %s32 = int_to_ptr.vmem [resolvable:$true] %s31
      %37 = dma.hbm_to_vmem [thread:$0]  %s1, 512, %s32, [#allocation6], 256, 256, 16
    $region9: #{tpu_custom_call.1} parent=1 // pred_fallthru
      _
    // Predicated region
    $region10: #{tpu_custom_call.1} parent=1 // pred_check
      _
    $region11: #{tpu_custom_call.1} parent=1 // pred_check_branch
      %39 = sbr.rel (0) target = $region13
    $region12: #{tpu_custom_call.1} parent=1 // pred_region
      %s41 = ssub.s32 64, 64
      %42 = vsyncadd [#allocation6], %s41
      %s44 = sshll.u32 [#allocation7], 4
      %s45 = int_to_ptr.vmem [resolvable:$true] %s44
      %47 = dma.hbm_to_vmem [thread:$0]  %s2, 64, %s45, [#allocation6]
    $region13: #{tpu_custom_call.1} parent=1 // pred_fallthru
      _
    // Predicated region
    $region14: #{tpu_custom_call.1} parent=1 // pred_check
      _
    $region15: #{tpu_custom_call.1} parent=1 // pred_check_branch
      %49 = sbr.rel (0) target = $region17
    $region16: #{tpu_custom_call.1} parent=1 // pred_region
      %s51 = ssub.s32 8192, 8192
      %52 = vsyncadd [#allocation9], %s51
      %s53 = sshll.u32 [#allocation8], 4
      %s54 = int_to_ptr.vmem [resolvable:$true] %s53
      %59 = dma.hbm_to_vmem [thread:$0]  %s3, 8192, %s54, [#allocation9], 128, 128, 8
    $region17: #{tpu_custom_call.1} parent=1 // pred_fallthru
      _
    // Predicated region
    $region18: #{tpu_custom_call.1} parent=1 // pred_check
      _
    $region19: #{tpu_custom_call.1} parent=1 // pred_check_branch
      %61 = sbr.rel (0) target = $region21
    $region20: #{tpu_custom_call.1} parent=1 // pred_region
      _
    $region21: #{tpu_custom_call.1} parent=1 // pred_fallthru
      _
    // Predicated region
    $region22: #{tpu_custom_call.1} parent=1 // pred_check
      _
    $region23: #{tpu_custom_call.1} parent=1 // pred_check_branch
      %63 = sbr.rel (0) target = $region25
    $region24: #{tpu_custom_call.1} parent=1 // pred_region
      %s65 = ssub.s32 2048, 2048
      %66 = vsyncadd [#allocation9], %s65
      %s67 = sshll.u32 [#allocation10], 4
      %s68 = int_to_ptr.vmem [resolvable:$true] %s67
      %73 = dma.hbm_to_vmem [thread:$0]  %s5, 2048, %s68, [#allocation9], 64, 64, 4
    $region25: #{tpu_custom_call.1} parent=1 // pred_fallthru
      _
    // Predicated region
    $region26: #{tpu_custom_call.1} parent=1 // pred_check
      _
    $region27: #{tpu_custom_call.1} parent=1 // pred_check_branch
      %75 = sbr.rel (0) target = $region29
    $region28: #{tpu_custom_call.1} parent=1 // pred_region
      _
    $region29: #{tpu_custom_call.1} parent=1 // pred_fallthru
      _
    // Predicated region
    $region30: #{tpu_custom_call.1} parent=1 // pred_check
      _
    $region31: #{tpu_custom_call.1} parent=1 // pred_check_branch
      %77 = sbr.rel (0) target = $region33
    $region32: #{tpu_custom_call.1} parent=1 // pred_region
      %78 = dma.done [#allocation3], 128
    $region33: #{tpu_custom_call.1} parent=1 // pred_fallthru
      _
    // Predicated region
    $region34: #{tpu_custom_call.1} parent=1 // pred_check
      _
    $region35: #{tpu_custom_call.1} parent=1 // pred_check_branch
      %80 = sbr.rel (0) target = $region37
    $region36: #{tpu_custom_call.1} parent=1 // pred_region
      %81 = dma.done [#allocation6], 512
    $region37: #{tpu_custom_call.1} parent=1 // pred_fallthru
      _
    // Predicated region
    $region38: #{tpu_custom_call.1} parent=1 // pred_check
      _
    $region39: #{tpu_custom_call.1} parent=1 // pred_check_branch
      %83 = sbr.rel (0) target = $region41
    $region40: #{tpu_custom_call.1} parent=1 // pred_region
      %84 = dma.done [#allocation6], 64
    $region41: #{tpu_custom_call.1} parent=1 // pred_fallthru
      _
    // Predicated region
    $region42: #{tpu_custom_call.1} parent=1 // pred_check
      _
    $region43: #{tpu_custom_call.1} parent=1 // pred_check_branch
      %86 = sbr.rel (0) target = $region45
    $region44: #{tpu_custom_call.1} parent=1 // pred_region
      %87 = dma.done [#allocation9], 8192
    $region45: #{tpu_custom_call.1} parent=1 // pred_fallthru
      _
    // Predicated region
    $region46: #{tpu_custom_call.1} parent=1 // pred_check
      _
    $region47: #{tpu_custom_call.1} parent=1 // pred_check_branch
      %89 = sbr.rel (0) target = $region49
    $region48: #{tpu_custom_call.1} parent=1 // pred_region
      %90 = dma.done [#allocation9], 2048
    $region49: #{tpu_custom_call.1} parent=1 // pred_fallthru
      _
    %v92 = vld [vmem:[#allocation2] sm:$0xff]
    %v93 = vpack.c.bf16 %v92, %v92
    %v94 = vld [vmem:[#allocation5] sm:$0xff]
    %v95 = vld [vmem:[#allocation5 + $0x8] sm:$0xff]
    %v96 = vld [vmem:[#allocation5 + $0x10] sm:$0xff]
    %v97 = vld [vmem:[#allocation5 + $0x18] sm:$0xff]
    %v98 = vld [vmem:[#allocation7] sm:$0xf]
    %v100 = vlaneseq
    %v101 = vshrl.u32 %v100, 7
    %v102 = vsub.s32 0, %v101
    %v103 = vrot.slane %v98, %v102
    %v104 = vlaneseq
    %v105 = vshrl.u32 %v104, 7
    %v106 = vsub.s32 1, %v105
    %v107 = vrot.slane %v98, %v106
    %v108 = vlaneseq
    %v109 = vshrl.u32 %v108, 7
    %v110 = vsub.s32 2, %v109
    %v111 = vrot.slane %v98, %v110
    %v112 = vlaneseq
    %v113 = vshrl.u32 %v112, 7
    %v114 = vsub.s32 3, %v113
    %v115 = vrot.slane %v98, %v114
    %v124 = vunpack.c.l.b16 %v94
    %v125 = vunpack.c.h.b16 %v94
    %v126 = vunpack.c.l.b16 %v95
    %v127 = vunpack.c.h.b16 %v95
    %v128 = vunpack.c.l.b16 %v96
    %v129 = vunpack.c.h.b16 %v96
    %v130 = vunpack.c.l.b16 %v97
    %v131 = vunpack.c.h.b16 %v97
    %v132 = vpack.c.b16 %v128, %v124
    %v133 = vpack.c.b16 %v129, %v125
    %v134 = vpack.c.b16 %v130, %v126
    %v135 = vpack.c.b16 %v131, %v127
    %vm140 = vcmask 130048
    %v142 = vsel %vm140, %v93, 0
    %144 = vmatprep.subr.bf16.mxu0 0
    %145 = vmatpush1.bf16.msra.mxu0 0
    %146 = vmatprep.subr.bf16.mxu0 0
    %147 = vmatpush1.bf16.msra.mxu0 0
    %148 = vmatprep.subr.bf16.mxu0 0
    %149 = vmatpush1.bf16.msra.mxu0 0
    %150 = vmatprep.subr.bf16.mxu0 0
    %151 = vmatpush1.bf16.msra.mxu0 0
    %152 = vmatprep.subr.bf16.mxu0 0
    %153 = vmatpush1.bf16.msra.mxu0 0
    %154 = vmatprep.subr.bf16.mxu0 0
    %155 = vmatpush1.bf16.msra.mxu0 0
    %156 = vmatprep.subr.bf16.mxu0 0
    %157 = vmatpush1.bf16.msra.mxu0 0
    %158 = vmatprep.subr.bf16.mxu0 %v133
    %159 = vmatpush1.bf16.msra.mxu0 %v132
    %160 = vmatprep.subr.bf16.mxu0 0
    %161 = vmatpush2.bf16.msra.mxu0 0
    %162 = vmatprep.subr.bf16.mxu0 0
    %163 = vmatpush2.bf16.msra.mxu0 0
    %164 = vmatprep.subr.bf16.mxu0 0
    %165 = vmatpush2.bf16.msra.mxu0 0
    %166 = vmatprep.subr.bf16.mxu0 0
    %167 = vmatpush2.bf16.msra.mxu0 0
    %168 = vmatprep.subr.bf16.mxu0 0
    %169 = vmatpush2.bf16.msra.mxu0 0
    %170 = vmatprep.subr.bf16.mxu0 0
    %171 = vmatpush2.bf16.msra.mxu0 0
    %172 = vmatprep.subr.bf16.mxu0 0
    %173 = vmatpush2.bf16.msra.mxu0 0
    %174 = vmatprep.subr.bf16.mxu0 0
    %175 = vmatpush2.bf16.msra.mxu0 0
    %176 = vmatprep.mubr.bf16.mxu0 0
    %177 = vmatmul.mubr.bf16.gmra.mxu0 %v142
    %v178 = vpop.f32.mrf.mxu0
    %v179 = vadd.f32 %v103, %v178
    %v180 = vpop.f32.mrf.mxu0
    %v181 = vadd.f32 %v107, %v180
    %v182 = vpop.f32.mrf.mxu0
    %v183 = vpop.f32.mrf.mxu0
    %184 = vdwg.mxu0
    %185 = vmatprep.subr.bf16.mxu0 0
    %186 = vmatpush1.bf16.msra.mxu0 0
    %187 = vmatprep.subr.bf16.mxu0 0
    %188 = vmatpush1.bf16.msra.mxu0 0
    %189 = vmatprep.subr.bf16.mxu0 0
    %190 = vmatpush1.bf16.msra.mxu0 0
    %191 = vmatprep.subr.bf16.mxu0 0
    %192 = vmatpush1.bf16.msra.mxu0 0
    %193 = vmatprep.subr.bf16.mxu0 0
    %194 = vmatpush1.bf16.msra.mxu0 0
    %195 = vmatprep.subr.bf16.mxu0 0
    %196 = vmatpush1.bf16.msra.mxu0 0
    %197 = vmatprep.subr.bf16.mxu0 0
    %198 = vmatpush1.bf16.msra.mxu0 0
    %199 = vmatprep.subr.bf16.mxu0 %v135
    %200 = vmatpush1.bf16.msra.mxu0 %v134
    %201 = vmatprep.subr.bf16.mxu0 0
    %202 = vmatpush2.bf16.msra.mxu0 0
    %203 = vmatprep.subr.bf16.mxu0 0
    %204 = vmatpush2.bf16.msra.mxu0 0
    %205 = vmatprep.subr.bf16.mxu0 0
    %206 = vmatpush2.bf16.msra.mxu0 0
    %207 = vmatprep.subr.bf16.mxu0 0
    %208 = vmatpush2.bf16.msra.mxu0 0
    %209 = vmatprep.subr.bf16.mxu0 0
    %210 = vmatpush2.bf16.msra.mxu0 0
    %211 = vmatprep.subr.bf16.mxu0 0
    %212 = vmatpush2.bf16.msra.mxu0 0
    %213 = vmatprep.subr.bf16.mxu0 0
    %214 = vmatpush2.bf16.msra.mxu0 0
    %215 = vmatprep.subr.bf16.mxu0 0
    %216 = vmatpush2.bf16.msra.mxu0 0
    %217 = vmatprep.mubr.bf16.mxu0 0
    %218 = vmatmul.mubr.bf16.gmra.mxu0 %v142
    %v219 = vpop.f32.mrf.mxu0
    %v220 = vadd.f32 %v111, %v219
    %v221 = vpop.f32.mrf.mxu0
    %v222 = vadd.f32 %v115, %v221
    %v223 = vpop.f32.mrf.mxu0
    %v224 = vpop.f32.mrf.mxu0
    %225 = vdwg.mxu0
    %v226 = vmax.f32 %v179, 0.0
    %v227 = vmax.f32 %v181, 0.0
    %v228 = vmax.f32 %v220, 0.0
    %v229 = vmax.f32 %v222, 0.0
    %v230 = vpack.c.bf16 %v226, %v226
    %v231 = vpack.c.bf16 %v227, %v227
    %v232 = vpack.c.bf16 %v228, %v228
    %v233 = vpack.c.bf16 %v229, %v229
    %v234 = vld [vmem:[#allocation8] sm:$0xff]
    %v235 = vld [vmem:[#allocation8 + $0x8] sm:$0xff]
    %v236 = vld [vmem:[#allocation8 + $0x10] sm:$0xff]
    %v237 = vld [vmem:[#allocation8 + $0x18] sm:$0xff]
    %v238 = vld [vmem:[#allocation8 + $0x20] sm:$0xff]
    %v239 = vld [vmem:[#allocation8 + $0x28] sm:$0xff]
    %v240 = vld [vmem:[#allocation8 + $0x30] sm:$0xff]
    %v241 = vld [vmem:[#allocation8 + $0x38] sm:$0xff]
    %v242 = vld [vmem:[#allocation8 + $0x40] sm:$0xff]
    %v243 = vld [vmem:[#allocation8 + $0x48] sm:$0xff]
    %v244 = vld [vmem:[#allocation8 + $0x50] sm:$0xff]
    %v245 = vld [vmem:[#allocation8 + $0x58] sm:$0xff]
    %v246 = vld [vmem:[#allocation8 + $0x60] sm:$0xff]
    %v247 = vld [vmem:[#allocation8 + $0x68] sm:$0xff]
    %v248 = vld [vmem:[#allocation8 + $0x70] sm:$0xff]
    %v249 = vld [vmem:[#allocation8 + $0x78] sm:$0xff]
    %v250 = vld [vmem:[#allocation8 + $0x80] sm:$0xff]
    %v251 = vld [vmem:[#allocation8 + $0x88] sm:$0xff]
    %v252 = vld [vmem:[#allocation8 + $0x90] sm:$0xff]
    %v253 = vld [vmem:[#allocation8 + $0x98] sm:$0xff]
    %v254 = vld [vmem:[#allocation8 + $0xa0] sm:$0xff]
    %v255 = vld [vmem:[#allocation8 + $0xa8] sm:$0xff]
    %v256 = vld [vmem:[#allocation8 + $0xb0] sm:$0xff]
    %v257 = vld [vmem:[#allocation8 + $0xb8] sm:$0xff]
    %v258 = vld [vmem:[#allocation8 + $0xc0] sm:$0xff]
    %v259 = vld [vmem:[#allocation8 + $0xc8] sm:$0xff]
    %v260 = vld [vmem:[#allocation8 + $0xd0] sm:$0xff]
    %v261 = vld [vmem:[#allocation8 + $0xd8] sm:$0xff]
    %v262 = vld [vmem:[#allocation8 + $0xe0] sm:$0xff]
    %v263 = vld [vmem:[#allocation8 + $0xe8] sm:$0xff]
    %v264 = vld [vmem:[#allocation8 + $0xf0] sm:$0xff]
    %v265 = vld [vmem:[#allocation8 + $0xf8] sm:$0xff]
    %v266 = vld [vmem:[#allocation8 + $0x100] sm:$0xff]
    %v267 = vld [vmem:[#allocation8 + $0x108] sm:$0xff]
    %v268 = vld [vmem:[#allocation8 + $0x110] sm:$0xff]
    %v269 = vld [vmem:[#allocation8 + $0x118] sm:$0xff]
    %v270 = vld [vmem:[#allocation8 + $0x120] sm:$0xff]
    %v271 = vld [vmem:[#allocation8 + $0x128] sm:$0xff]
    %v272 = vld [vmem:[#allocation8 + $0x130] sm:$0xff]
    %v273 = vld [vmem:[#allocation8 + $0x138] sm:$0xff]
    %v274 = vld [vmem:[#allocation8 + $0x140] sm:$0xff]
    %v275 = vld [vmem:[#allocation8 + $0x148] sm:$0xff]
    %v276 = vld [vmem:[#allocation8 + $0x150] sm:$0xff]
    %v277 = vld [vmem:[#allocation8 + $0x158] sm:$0xff]
    %v278 = vld [vmem:[#allocation8 + $0x160] sm:$0xff]
    %v279 = vld [vmem:[#allocation8 + $0x168] sm:$0xff]
    %v280 = vld [vmem:[#allocation8 + $0x170] sm:$0xff]
    %v281 = vld [vmem:[#allocation8 + $0x178] sm:$0xff]
    %v282 = vld [vmem:[#allocation8 + $0x180] sm:$0xff]
    %v283 = vld [vmem:[#allocation8 + $0x188] sm:$0xff]
    %v284 = vld [vmem:[#allocation8 + $0x190] sm:$0xff]
    %v285 = vld [vmem:[#allocation8 + $0x198] sm:$0xff]
    %v286 = vld [vmem:[#allocation8 + $0x1a0] sm:$0xff]
    %v287 = vld [vmem:[#allocation8 + $0x1a8] sm:$0xff]
    %v288 = vld [vmem:[#allocation8 + $0x1b0] sm:$0xff]
    %v289 = vld [vmem:[#allocation8 + $0x1b8] sm:$0xff]
    %v290 = vld [vmem:[#allocation8 + $0x1c0] sm:$0xff]
    %v291 = vld [vmem:[#allocation8 + $0x1c8] sm:$0xff]
    %v292 = vld [vmem:[#allocation8 + $0x1d0] sm:$0xff]
    %v293 = vld [vmem:[#allocation8 + $0x1d8] sm:$0xff]
    %v294 = vld [vmem:[#allocation8 + $0x1e0] sm:$0xff]
    %v295 = vld [vmem:[#allocation8 + $0x1e8] sm:$0xff]
    %v296 = vld [vmem:[#allocation8 + $0x1f0] sm:$0xff]
    %v297 = vld [vmem:[#allocation8 + $0x1f8] sm:$0xff]
    %v298 = vld [vmem:[%s4] sm:$0x3]
    %v300 = vlaneseq
    %v301 = vshrl.u32 %v300, 7
    %v302 = vsub.s32 0, %v301
    %v303 = vrot.slane %v298, %v302
    %v304 = vlaneseq
    %v305 = vshrl.u32 %v304, 7
    %v306 = vsub.s32 1, %v305
    %v307 = vrot.slane %v298, %v306
    %v374 = vunpack.c.l.b16 %v234
    %v375 = vunpack.c.h.b16 %v234
    %v376 = vunpack.c.l.b16 %v235
    %v377 = vunpack.c.h.b16 %v235
    %v378 = vunpack.c.l.b16 %v236
    %v379 = vunpack.c.h.b16 %v236
    %v380 = vunpack.c.l.b16 %v237
    %v381 = vunpack.c.h.b16 %v237
    %v382 = vunpack.c.l.b16 %v238
    %v383 = vunpack.c.h.b16 %v238
    %v384 = vunpack.c.l.b16 %v239
    %v385 = vunpack.c.h.b16 %v239
    %v386 = vunpack.c.l.b16 %v240
    %v387 = vunpack.c.h.b16 %v240
    %v388 = vunpack.c.l.b16 %v241
    %v389 = vunpack.c.h.b16 %v241
    %v390 = vunpack.c.l.b16 %v242
    %v391 = vunpack.c.h.b16 %v242
    %v392 = vunpack.c.l.b16 %v243
    %v393 = vunpack.c.h.b16 %v243
    %v394 = vunpack.c.l.b16 %v244
    %v395 = vunpack.c.h.b16 %v244
    %v396 = vunpack.c.l.b16 %v245
    %v397 = vunpack.c.h.b16 %v245
    %v398 = vunpack.c.l.b16 %v246
    %v399 = vunpack.c.h.b16 %v246
    %v400 = vunpack.c.l.b16 %v247
    %v401 = vunpack.c.h.b16 %v247
    %v402 = vunpack.c.l.b16 %v248
    %v403 = vunpack.c.h.b16 %v248
    %v404 = vunpack.c.l.b16 %v249
    %v405 = vunpack.c.h.b16 %v249
    %v406 = vunpack.c.l.b16 %v250
    %v407 = vunpack.c.h.b16 %v250
    %v408 = vunpack.c.l.b16 %v251
    %v409 = vunpack.c.h.b16 %v251
    %v410 = vunpack.c.l.b16 %v252
    %v411 = vunpack.c.h.b16 %v252
    %v412 = vunpack.c.l.b16 %v253
    %v413 = vunpack.c.h.b16 %v253
    %v414 = vunpack.c.l.b16 %v254
    %v415 = vunpack.c.h.b16 %v254
    %v416 = vunpack.c.l.b16 %v255
    %v417 = vunpack.c.h.b16 %v255
    %v418 = vunpack.c.l.b16 %v256
    %v419 = vunpack.c.h.b16 %v256
    %v420 = vunpack.c.l.b16 %v257
    %v421 = vunpack.c.h.b16 %v257
    %v422 = vunpack.c.l.b16 %v258
    %v423 = vunpack.c.h.b16 %v258
    %v424 = vunpack.c.l.b16 %v259
    %v425 = vunpack.c.h.b16 %v259
    %v426 = vunpack.c.l.b16 %v260
    %v427 = vunpack.c.h.b16 %v260
    %v428 = vunpack.c.l.b16 %v261
    %v429 = vunpack.c.h.b16 %v261
    %v430 = vunpack.c.l.b16 %v262
    %v431 = vunpack.c.h.b16 %v262
    %v432 = vunpack.c.l.b16 %v263
    %v433 = vunpack.c.h.b16 %v263
    %v434 = vunpack.c.l.b16 %v264
    %v435 = vunpack.c.h.b16 %v264
    %v436 = vunpack.c.l.b16 %v265
    %v437 = vunpack.c.h.b16 %v265
    %v438 = vunpack.c.l.b16 %v266
    %v439 = vunpack.c.h.b16 %v266
    %v440 = vunpack.c.l.b16 %v267
    %v441 = vunpack.c.h.b16 %v267
    %v442 = vunpack.c.l.b16 %v268
    %v443 = vunpack.c.h.b16 %v268
    %v444 = vunpack.c.l.b16 %v269
    %v445 = vunpack.c.h.b16 %v269
    %v446 = vunpack.c.l.b16 %v270
    %v447 = vunpack.c.h.b16 %v270
    %v448 = vunpack.c.l.b16 %v271
    %v449 = vunpack.c.h.b16 %v271
    %v450 = vunpack.c.l.b16 %v272
    %v451 = vunpack.c.h.b16 %v272
    %v452 = vunpack.c.l.b16 %v273
    %v453 = vunpack.c.h.b16 %v273
    %v454 = vunpack.c.l.b16 %v274
    %v455 = vunpack.c.h.b16 %v274
    %v456 = vunpack.c.l.b16 %v275
    %v457 = vunpack.c.h.b16 %v275
    %v458 = vunpack.c.l.b16 %v276
    %v459 = vunpack.c.h.b16 %v276
    %v460 = vunpack.c.l.b16 %v277
    %v461 = vunpack.c.h.b16 %v277
    %v462 = vunpack.c.l.b16 %v278
    %v463 = vunpack.c.h.b16 %v278
    %v464 = vunpack.c.l.b16 %v279
    %v465 = vunpack.c.h.b16 %v279
    %v466 = vunpack.c.l.b16 %v280
    %v467 = vunpack.c.h.b16 %v280
    %v468 = vunpack.c.l.b16 %v281
    %v469 = vunpack.c.h.b16 %v281
    %v470 = vunpack.c.l.b16 %v282
    %v471 = vunpack.c.h.b16 %v282
    %v472 = vunpack.c.l.b16 %v283
    %v473 = vunpack.c.h.b16 %v283
    %v474 = vunpack.c.l.b16 %v284
    %v475 = vunpack.c.h.b16 %v284
    %v476 = vunpack.c.l.b16 %v285
    %v477 = vunpack.c.h.b16 %v285
    %v478 = vunpack.c.l.b16 %v286
    %v479 = vunpack.c.h.b16 %v286
    %v480 = vunpack.c.l.b16 %v287
    %v481 = vunpack.c.h.b16 %v287
    %v482 = vunpack.c.l.b16 %v288
    %v483 = vunpack.c.h.b16 %v288
    %v484 = vunpack.c.l.b16 %v289
    %v485 = vunpack.c.h.b16 %v289
    %v486 = vunpack.c.l.b16 %v290
    %v487 = vunpack.c.h.b16 %v290
    %v488 = vunpack.c.l.b16 %v291
    %v489 = vunpack.c.h.b16 %v291
    %v490 = vunpack.c.l.b16 %v292
    %v491 = vunpack.c.h.b16 %v292
    %v492 = vunpack.c.l.b16 %v293
    %v493 = vunpack.c.h.b16 %v293
    %v494 = vunpack.c.l.b16 %v294
    %v495 = vunpack.c.h.b16 %v294
    %v496 = vunpack.c.l.b16 %v295
    %v497 = vunpack.c.h.b16 %v295
    %v498 = vunpack.c.l.b16 %v296
    %v499 = vunpack.c.h.b16 %v296
    %v500 = vunpack.c.l.b16 %v297
    %v501 = vunpack.c.h.b16 %v297
    %v502 = vpack.c.b16 %v376, %v374
    %v503 = vpack.c.b16 %v377, %v375
    %v504 = vpack.c.b16 %v380, %v378
    %v505 = vpack.c.b16 %v381, %v379
    %v506 = vpack.c.b16 %v384, %v382
    %v507 = vpack.c.b16 %v385, %v383
    %v508 = vpack.c.b16 %v388, %v386
    %v509 = vpack.c.b16 %v389, %v387
    %v510 = vpack.c.b16 %v392, %v390
    %v511 = vpack.c.b16 %v393, %v391
    %v512 = vpack.c.b16 %v396, %v394
    %v513 = vpack.c.b16 %v397, %v395
    %v514 = vpack.c.b16 %v400, %v398
    %v515 = vpack.c.b16 %v401, %v399
    %v516 = vpack.c.b16 %v404, %v402
    %v517 = vpack.c.b16 %v405, %v403
    %v518 = vpack.c.b16 %v408, %v406
    %v519 = vpack.c.b16 %v409, %v407
    %v520 = vpack.c.b16 %v412, %v410
    %v521 = vpack.c.b16 %v413, %v411
    %v522 = vpack.c.b16 %v416, %v414
    %v523 = vpack.c.b16 %v417, %v415
    %v524 = vpack.c.b16 %v420, %v418
    %v525 = vpack.c.b16 %v421, %v419
    %v526 = vpack.c.b16 %v424, %v422
    %v527 = vpack.c.b16 %v425, %v423
    %v528 = vpack.c.b16 %v428, %v426
    %v529 = vpack.c.b16 %v429, %v427
    %v530 = vpack.c.b16 %v432, %v430
    %v531 = vpack.c.b16 %v433, %v431
    %v532 = vpack.c.b16 %v436, %v434
    %v533 = vpack.c.b16 %v437, %v435
    %v534 = vpack.c.b16 %v440, %v438
    %v535 = vpack.c.b16 %v441, %v439
    %v536 = vpack.c.b16 %v444, %v442
    %v537 = vpack.c.b16 %v445, %v443
    %v538 = vpack.c.b16 %v448, %v446
    %v539 = vpack.c.b16 %v449, %v447
    %v540 = vpack.c.b16 %v452, %v450
    %v541 = vpack.c.b16 %v453, %v451
    %v542 = vpack.c.b16 %v456, %v454
    %v543 = vpack.c.b16 %v457, %v455
    %v544 = vpack.c.b16 %v460, %v458
    %v545 = vpack.c.b16 %v461, %v459
    %v546 = vpack.c.b16 %v464, %v462
    %v547 = vpack.c.b16 %v465, %v463
    %v548 = vpack.c.b16 %v468, %v466
    %v549 = vpack.c.b16 %v469, %v467
    %v550 = vpack.c.b16 %v472, %v470
    %v551 = vpack.c.b16 %v473, %v471
    %v552 = vpack.c.b16 %v476, %v474
    %v553 = vpack.c.b16 %v477, %v475
    %v554 = vpack.c.b16 %v480, %v478
    %v555 = vpack.c.b16 %v481, %v479
    %v556 = vpack.c.b16 %v484, %v482
    %v557 = vpack.c.b16 %v485, %v483
    %v558 = vpack.c.b16 %v488, %v486
    %v559 = vpack.c.b16 %v489, %v487
    %v560 = vpack.c.b16 %v492, %v490
    %v561 = vpack.c.b16 %v493, %v491
    %v562 = vpack.c.b16 %v496, %v494
    %v563 = vpack.c.b16 %v497, %v495
    %v564 = vpack.c.b16 %v500, %v498
    %v565 = vpack.c.b16 %v501, %v499
    %630 = vmatprep.subr.bf16.mxu0 %v517
    %631 = vmatpush1.bf16.msra.mxu0 %v516
    %632 = vmatprep.subr.bf16.mxu0 %v515
    %633 = vmatpush1.bf16.msra.mxu0 %v514
    %634 = vmatprep.subr.bf16.mxu0 %v513
    %635 = vmatpush1.bf16.msra.mxu0 %v512
    %636 = vmatprep.subr.bf16.mxu0 %v511
    %637 = vmatpush1.bf16.msra.mxu0 %v510
    %638 = vmatprep.subr.bf16.mxu0 %v509
    %639 = vmatpush1.bf16.msra.mxu0 %v508
    %640 = vmatprep.subr.bf16.mxu0 %v507
    %641 = vmatpush1.bf16.msra.mxu0 %v506
    %642 = vmatprep.subr.bf16.mxu0 %v505
    %643 = vmatpush1.bf16.msra.mxu0 %v504
    %644 = vmatprep.subr.bf16.mxu0 %v503
    %645 = vmatpush1.bf16.msra.mxu0 %v502
    %646 = vmatprep.subr.bf16.mxu0 %v533
    %647 = vmatpush2.bf16.msra.mxu0 %v532
    %648 = vmatprep.subr.bf16.mxu0 %v531
    %649 = vmatpush2.bf16.msra.mxu0 %v530
    %650 = vmatprep.subr.bf16.mxu0 %v529
    %651 = vmatpush2.bf16.msra.mxu0 %v528
    %652 = vmatprep.subr.bf16.mxu0 %v527
    %653 = vmatpush2.bf16.msra.mxu0 %v526
    %654 = vmatprep.subr.bf16.mxu0 %v525
    %655 = vmatpush2.bf16.msra.mxu0 %v524
    %656 = vmatprep.subr.bf16.mxu0 %v523
    %657 = vmatpush2.bf16.msra.mxu0 %v522
    %658 = vmatprep.subr.bf16.mxu0 %v521
    %659 = vmatpush2.bf16.msra.mxu0 %v520
    %660 = vmatprep.subr.bf16.mxu0 %v519
    %661 = vmatpush2.bf16.msra.mxu0 %v518
    %662 = vmatprep.mubr.bf16.mxu0 %v231
    %663 = vmatmul.mubr.bf16.gmra.mxu0 %v230
    %v664 = vpop.f32.mrf.mxu0
    %v665 = vadd.f32 %v303, %v664
    %v666 = vpop.f32.mrf.mxu0
    %v667 = vadd.f32 %v307, %v666
    %v668 = vpop.f32.mrf.mxu0
    %v669 = vpop.f32.mrf.mxu0
    %670 = vdwg.mxu0
    %671 = vmatprep.subr.bf16.mxu0 %v549
    %672 = vmatpush1.bf16.msra.mxu0 %v548
    %673 = vmatprep.subr.bf16.mxu0 %v547
    %674 = vmatpush1.bf16.msra.mxu0 %v546
    %675 = vmatprep.subr.bf16.mxu0 %v545
    %676 = vmatpush1.bf16.msra.mxu0 %v544
    %677 = vmatprep.subr.bf16.mxu0 %v543
    %678 = vmatpush1.bf16.msra.mxu0 %v542
    %679 = vmatprep.subr.bf16.mxu0 %v541
    %680 = vmatpush1.bf16.msra.mxu0 %v540
    %681 = vmatprep.subr.bf16.mxu0 %v539
    %682 = vmatpush1.bf16.msra.mxu0 %v538
    %683 = vmatprep.subr.bf16.mxu0 %v537
    %684 = vmatpush1.bf16.msra.mxu0 %v536
    %685 = vmatprep.subr.bf16.mxu0 %v535
    %686 = vmatpush1.bf16.msra.mxu0 %v534
    %687 = vmatprep.subr.bf16.mxu0 %v565
    %688 = vmatpush2.bf16.msra.mxu0 %v564
    %689 = vmatprep.subr.bf16.mxu0 %v563
    %690 = vmatpush2.bf16.msra.mxu0 %v562
    %691 = vmatprep.subr.bf16.mxu0 %v561
    %692 = vmatpush2.bf16.msra.mxu0 %v560
    %693 = vmatprep.subr.bf16.mxu0 %v559
    %694 = vmatpush2.bf16.msra.mxu0 %v558
    %695 = vmatprep.subr.bf16.mxu0 %v557
    %696 = vmatpush2.bf16.msra.mxu0 %v556
    %697 = vmatprep.subr.bf16.mxu0 %v555
    %698 = vmatpush2.bf16.msra.mxu0 %v554
    %699 = vmatprep.subr.bf16.mxu0 %v553
    %700 = vmatpush2.bf16.msra.mxu0 %v552
    %701 = vmatprep.subr.bf16.mxu0 %v551
    %702 = vmatpush2.bf16.msra.mxu0 %v550
    %703 = vmatprep.mubr.bf16.mxu0 %v233
    %704 = vmatmul.mubr.bf16.gmra.mxu0 %v232
    %v705 = vpop.f32.mrf.mxu0
    %v706 = vadd.f32 %v665, %v705
    %v707 = vpop.f32.mrf.mxu0
    %v708 = vadd.f32 %v667, %v707
    %v709 = vpop.f32.mrf.mxu0
    %v710 = vpop.f32.mrf.mxu0
    %711 = vdwg.mxu0
    %v712 = vmax.f32 %v706, 0.0
    %v713 = vmax.f32 %v708, 0.0
    %v714 = vpack.c.bf16 %v712, %v712
    %v715 = vpack.c.bf16 %v713, %v713
    %v716 = vld [vmem:[#allocation10] sm:$0xf]
    %v717 = vld [vmem:[#allocation10 + $0x4] sm:$0xf]
    %v718 = vld [vmem:[#allocation10 + $0x8] sm:$0xf]
    %v719 = vld [vmem:[#allocation10 + $0xc] sm:$0xf]
    %v720 = vld [vmem:[#allocation10 + $0x10] sm:$0xf]
    %v721 = vld [vmem:[#allocation10 + $0x14] sm:$0xf]
    %v722 = vld [vmem:[#allocation10 + $0x18] sm:$0xf]
    %v723 = vld [vmem:[#allocation10 + $0x1c] sm:$0xf]
    %v724 = vld [vmem:[#allocation10 + $0x20] sm:$0xf]
    %v725 = vld [vmem:[#allocation10 + $0x24] sm:$0xf]
    %v726 = vld [vmem:[#allocation10 + $0x28] sm:$0xf]
    %v727 = vld [vmem:[#allocation10 + $0x2c] sm:$0xf]
    %v728 = vld [vmem:[#allocation10 + $0x30] sm:$0xf]
    %v729 = vld [vmem:[#allocation10 + $0x34] sm:$0xf]
    %v730 = vld [vmem:[#allocation10 + $0x38] sm:$0xf]
    %v731 = vld [vmem:[#allocation10 + $0x3c] sm:$0xf]
    %v732 = vld [vmem:[#allocation10 + $0x40] sm:$0xf]
    %v733 = vld [vmem:[#allocation10 + $0x44] sm:$0xf]
    %v734 = vld [vmem:[#allocation10 + $0x48] sm:$0xf]
    %v735 = vld [vmem:[#allocation10 + $0x4c] sm:$0xf]
    %v736 = vld [vmem:[#allocation10 + $0x50] sm:$0xf]
    %v737 = vld [vmem:[#allocation10 + $0x54] sm:$0xf]
    %v738 = vld [vmem:[#allocation10 + $0x58] sm:$0xf]
    %v739 = vld [vmem:[#allocation10 + $0x5c] sm:$0xf]
    %v740 = vld [vmem:[#allocation10 + $0x60] sm:$0xf]
    %v741 = vld [vmem:[#allocation10 + $0x64] sm:$0xf]
    %v742 = vld [vmem:[#allocation10 + $0x68] sm:$0xf]
    %v743 = vld [vmem:[#allocation10 + $0x6c] sm:$0xf]
    %v744 = vld [vmem:[#allocation10 + $0x70] sm:$0xf]
    %v745 = vld [vmem:[#allocation10 + $0x74] sm:$0xf]
    %v746 = vld [vmem:[#allocation10 + $0x78] sm:$0xf]
    %v747 = vld [vmem:[#allocation10 + $0x7c] sm:$0xf]
    %v748 = vld [vmem:[%s6] sm:$0x1]
    %v750 = vlaneseq
    %v751 = vshrl.u32 %v750, 7
    %v752 = vsub.s32 0, %v751
    %v753 = vrot.slane %v748, %v752
    %v787 = vunpack.c.l.b16 %v716
    %v788 = vunpack.c.l.b16 %v717
    %v789 = vunpack.c.l.b16 %v718
    %v790 = vunpack.c.l.b16 %v719
    %v791 = vunpack.c.l.b16 %v720
    %v792 = vunpack.c.l.b16 %v721
    %v793 = vunpack.c.l.b16 %v722
    %v794 = vunpack.c.l.b16 %v723
    %v795 = vunpack.c.l.b16 %v724
    %v796 = vunpack.c.l.b16 %v725
    %v797 = vunpack.c.l.b16 %v726
    %v798 = vunpack.c.l.b16 %v727
    %v799 = vunpack.c.l.b16 %v728
    %v800 = vunpack.c.l.b16 %v729
    %v801 = vunpack.c.l.b16 %v730
    %v802 = vunpack.c.l.b16 %v731
    %v803 = vunpack.c.l.b16 %v732
    %v804 = vunpack.c.l.b16 %v733
    %v805 = vunpack.c.l.b16 %v734
    %v806 = vunpack.c.l.b16 %v735
    %v807 = vunpack.c.l.b16 %v736
    %v808 = vunpack.c.l.b16 %v737
    %v809 = vunpack.c.l.b16 %v738
    %v810 = vunpack.c.l.b16 %v739
    %v811 = vunpack.c.l.b16 %v740
    %v812 = vunpack.c.l.b16 %v741
    %v813 = vunpack.c.l.b16 %v742
    %v814 = vunpack.c.l.b16 %v743
    %v815 = vunpack.c.l.b16 %v744
    %v816 = vunpack.c.l.b16 %v745
    %v817 = vunpack.c.l.b16 %v746
    %v818 = vunpack.c.l.b16 %v747
    %v819 = vpack.c.b16 %v788, %v787
    %v820 = vpack.c.b16 %v790, %v789
    %v821 = vpack.c.b16 %v792, %v791
    %v822 = vpack.c.b16 %v794, %v793
    %v823 = vpack.c.b16 %v796, %v795
    %v824 = vpack.c.b16 %v798, %v797
    %v825 = vpack.c.b16 %v800, %v799
    %v826 = vpack.c.b16 %v802, %v801
    %v827 = vpack.c.b16 %v804, %v803
    %v828 = vpack.c.b16 %v806, %v805
    %v829 = vpack.c.b16 %v808, %v807
    %v830 = vpack.c.b16 %v810, %v809
    %v831 = vpack.c.b16 %v812, %v811
    %v832 = vpack.c.b16 %v814, %v813
    %v833 = vpack.c.b16 %v816, %v815
    %v834 = vpack.c.b16 %v818, %v817
    %851 = vmatprep.subr.bf16.mxu0 0
    %852 = vmatpush1.bf16.msra.mxu0 %v826
    %853 = vmatprep.subr.bf16.mxu0 0
    %854 = vmatpush1.bf16.msra.mxu0 %v825
    %855 = vmatprep.subr.bf16.mxu0 0
    %856 = vmatpush1.bf16.msra.mxu0 %v824
    %857 = vmatprep.subr.bf16.mxu0 0
    %858 = vmatpush1.bf16.msra.mxu0 %v823
    %859 = vmatprep.subr.bf16.mxu0 0
    %860 = vmatpush1.bf16.msra.mxu0 %v822
    %861 = vmatprep.subr.bf16.mxu0 0
    %862 = vmatpush1.bf16.msra.mxu0 %v821
    %863 = vmatprep.subr.bf16.mxu0 0
    %864 = vmatpush1.bf16.msra.mxu0 %v820
    %865 = vmatprep.subr.bf16.mxu0 0
    %866 = vmatpush1.bf16.msra.mxu0 %v819
    %867 = vmatprep.subr.bf16.mxu0 0
    %868 = vmatpush2.bf16.msra.mxu0 %v834
    %869 = vmatprep.subr.bf16.mxu0 0
    %870 = vmatpush2.bf16.msra.mxu0 %v833
    %871 = vmatprep.subr.bf16.mxu0 0
    %872 = vmatpush2.bf16.msra.mxu0 %v832
    %873 = vmatprep.subr.bf16.mxu0 0
    %874 = vmatpush2.bf16.msra.mxu0 %v831
    %875 = vmatprep.subr.bf16.mxu0 0
    %876 = vmatpush2.bf16.msra.mxu0 %v830
    %877 = vmatprep.subr.bf16.mxu0 0
    %878 = vmatpush2.bf16.msra.mxu0 %v829
    %879 = vmatprep.subr.bf16.mxu0 0
    %880 = vmatpush2.bf16.msra.mxu0 %v828
    %881 = vmatprep.subr.bf16.mxu0 0
    %882 = vmatpush2.bf16.msra.mxu0 %v827
    %883 = vmatprep.mubr.bf16.mxu0 %v715
    %884 = vmatmul.mubr.bf16.gmra.mxu0 %v714
    %v885 = vpop.f32.mrf.mxu0
    %v886 = vadd.f32 %v753, %v885
    %v887 = vpop.f32.mrf.mxu0
    %v888 = vpop.f32.mrf.mxu0
    %v889 = vpop.f32.mrf.mxu0
    %890 = vdwg.mxu0
    %891 = vst [vmem:[#allocation11] sm:$0xff] %v886
    // Predicated region
    $region50: #{tpu_custom_call.1} parent=1 // pred_check
      _
    $region51: #{tpu_custom_call.1} parent=1 // pred_check_branch
      %893 = sbr.rel (0) target = $region53
    $region52: #{tpu_custom_call.1} parent=1 // pred_region
      %s895 = ssub.s32 128, 128
      %896 = vsyncadd [#allocation4], %s895
      %s898 = sshll.u32 [#allocation11], 4
      %s899 = int_to_ptr.vmem [resolvable:$true] %s898
      %901 = dma.vmem_to_hbm [thread:$0]  %s899, 128, %s7, [#allocation4]
    $region53: #{tpu_custom_call.1} parent=1 // pred_fallthru
      _
    // Predicated region
    $region54: #{tpu_custom_call.1} parent=1 // pred_check
      _
    $region55: #{tpu_custom_call.1} parent=1 // pred_check_branch
      %903 = sbr.rel (0) target = $region57
    $region56: #{tpu_custom_call.1} parent=1 // pred_region
      %904 = dma.done [#allocation4], 128
    $region57: #{tpu_custom_call.1} parent=1 // pred_fallthru
      _
    %905 = vsyncpa [#allocation3], 1
    %906 = vsyncpa [#allocation6], 1
    %907 = vsyncpa [#allocation9], 1
    %908 = vsyncpa [#allocation4], 1

</llo_original>
